<compile_context>
chip_gen: v5e
topology: v5e:2x2
jax: 0.10.0
libtpu: 0.0.40
codegen_flags: <defaults>
</compile_context>

<pallas_src>
import jax
import jax.numpy as jnp
from jax.experimental import pallas as pl
from jax.experimental.pallas import tpu as pltpu

_BN_EPS = 1e-5


def _bn_relu_fused(h, gamma, beta, inv_b):
    """Training-mode BatchNorm1d + ReLU, one-pass stats, gamma folded in.

    Pure jnp on values, so it is shared between the Pallas kernel body and the
    matched-precision JAX reference.
    """
    s1 = jnp.sum(h, axis=0, keepdims=True)          # XLU reduce
    s2 = jnp.sum(h * h, axis=0, keepdims=True)      # XLU reduce (back-to-back)
    mean = s1 * inv_b
    var = s2 * inv_b - mean * mean                  # biased variance
    scale = gamma * jax.lax.rsqrt(var + _BN_EPS)    # EUP rsqrt (free slot)
    shift = beta - mean * scale
    return jnp.maximum(h * scale + shift, 0.0)


def decoder_kernel(x_ref, w1_ref, w2_ref, w3_ref, b3_ref, bn_ref, o_ref):
    inv_b = 1.0 / x_ref.shape[0]                    # static batch size

    bn = bn_ref[...]                                # (4, H): g1, be1, g2, be2
    g1, be1 = bn[0:1, :], bn[1:2, :]
    g2, be2 = bn[2:3, :], bn[3:4, :]

    # Layer 1: Linear (bias cancelled by BN mean-subtract) -> BN -> ReLU
    h = jnp.dot(x_ref[...].astype(jnp.bfloat16), w1_ref[...],
                preferred_element_type=jnp.float32)
    h = _bn_relu_fused(h, g1, be1, inv_b)

    # Layer 2: Linear (bias cancelled by BN mean-subtract) -> BN -> ReLU
    h = jnp.dot(h.astype(jnp.bfloat16), w2_ref[...],
                preferred_element_type=jnp.float32)
    h = _bn_relu_fused(h, g2, be2, inv_b)

    # Layer 3: Linear (output, bias kept).  OUT=784 = 6*128+16 -> last lane
    # group uses a masked store; acceptable (~2% lane waste) at these sizes.
    out = jnp.dot(h.astype(jnp.bfloat16), w3_ref[...],
                  preferred_element_type=jnp.float32) + b3_ref[...]
    o_ref[...] = out.astype(o_ref.dtype)


def decoder_forward(x, params):
    """x: (B, latent_dim) float32.  Returns (B, output_size) float32."""
    B = x.shape[0]
    L, H = params["w1"].shape
    out_dim = params["w3"].shape[1]

    # bf16 weights: MXU-native, halves weight HBM->VMEM traffic.
    w1 = params["w1"].astype(jnp.bfloat16)
    w2 = params["w2"].astype(jnp.bfloat16)
    w3 = params["w3"].astype(jnp.bfloat16)
    b3 = params["b3"]
    # Pack the four tiny per-feature BN params into ONE array -> one DMA.
    bn = jnp.concatenate(
        [params["g1"], params["be1"], params["g2"], params["be2"]], axis=0)

    args = (x, w1, w2, w3, b3, bn)

    flops = 2 * B * (L * H + H * H + H * out_dim) + 12 * B * H
    bytes_accessed = (
        x.size * 4 + w1.size * 2 + w2.size * 2 + w3.size * 2
        + b3.size * 4 + bn.size * 4 + B * out_dim * 4)

    # Everything fits in VMEM at these sizes -> single grid point, full-array
    # blocks (no tiling / pipelining needed).  If n_hidden ever grows to the
    # point that w2/w3 approach v7x's 64 MiB per-TC VMEM, tile K/N with
    # BlockSpec and set vmem_limit_bytes instead.
    return pl.pallas_call(
        decoder_kernel,
        out_shape=jax.ShapeDtypeStruct((B, out_dim), jnp.float32),
        in_specs=[pl.BlockSpec(memory_space=pltpu.MemorySpace.VMEM)] * len(args),
        out_specs=pl.BlockSpec(memory_space=pltpu.MemorySpace.VMEM),
        cost_estimate=pl.CostEstimate(
            flops=flops, transcendentals=2 * H, bytes_accessed=bytes_accessed),
    )(*args)


def init_params(key, latent_dim, n_hidden, output_size):
    """Deterministic synthetic parameters (shapes match nn.Linear/BatchNorm1d).

    b1/b2 are still generated (the faithful PyTorch reference uses them) even
    though the kernel drops them — they are exactly cancelled by training-mode
    BatchNorm's mean subtraction.
    """
    ks = jax.random.split(key, 6)

    def linear(kw, kb, fan_in, fan_out):
        bound = 1.0 / jnp.sqrt(fan_in)
        w = jax.random.uniform(kw, (fan_in, fan_out), jnp.float32, -bound, bound)
        b = jax.random.uniform(kb, (1, fan_out), jnp.float32, -bound, bound)
        return w, b

    w1, b1 = linear(ks[0], ks[1], latent_dim, n_hidden)
    w2, b2 = linear(ks[2], ks[3], n_hidden, n_hidden)
    w3, b3 = linear(ks[4], ks[5], n_hidden, output_size)
    return {
        "w1": w1, "b1": b1,
        "g1": jnp.ones((1, n_hidden), jnp.float32),
        "be1": jnp.zeros((1, n_hidden), jnp.float32),
        "w2": w2, "b2": b2,
        "g2": jnp.ones((1, n_hidden), jnp.float32),
        "be2": jnp.zeros((1, n_hidden), jnp.float32),
        "w3": w3, "b3": b3,
    }


def decoder_ref_matched(x, p):
    """Pure-JAX reference with the SAME numerics as the kernel (bf16 matmul
    inputs, f32 accumulation, fused one-pass BN, b1/b2 dropped)."""
    inv_b = 1.0 / x.shape[0]
    w1 = p["w1"].astype(jnp.bfloat16)
    w2 = p["w2"].astype(jnp.bfloat16)
    w3 = p["w3"].astype(jnp.bfloat16)
    h = jnp.dot(x.astype(jnp.bfloat16), w1, preferred_element_type=jnp.float32)
    h = _bn_relu_fused(h, p["g1"], p["be1"], inv_b)
    h = jnp.dot(h.astype(jnp.bfloat16), w2, preferred_element_type=jnp.float32)
    h = _bn_relu_fused(h, p["g2"], p["be2"], inv_b)
    return jnp.dot(h.astype(jnp.bfloat16), w3,
                   preferred_element_type=jnp.float32) + p["b3"]


def decoder_ref_pytorch(x, p):
    """Faithful full-f32 reference of the PyTorch module (biases, two-pass BN)."""
    def bn_relu(h, g, be):
        m = jnp.mean(h, axis=0, keepdims=True)
        v = jnp.mean((h - m) ** 2, axis=0, keepdims=True)
        return jnp.maximum((h - m) / jnp.sqrt(v + _BN_EPS) * g + be, 0.0)

    h = bn_relu(x @ p["w1"] + p["b1"], p["g1"], p["be1"])
    h = bn_relu(h @ p["w2"] + p["b2"], p["g2"], p["be2"])
    return h @ p["w3"] + p["b3"]


if __name__ == "__main__":
    # hparams = {'latent_dim': 8, 'n_hidden': 32}, output_size = 28*28.
    # B raised to 128 (per perf review) to amortize per-call overhead and fill
    # more MXU rows; working set is still ~130 KB of VMEM.
    B, LATENT, HIDDEN, OUT = 128, 8, 32, 28 * 28

    key = jax.random.PRNGKey(0)
    kx, kp = jax.random.split(key)
    x = jax.random.normal(kx, (B, LATENT), jnp.float32)
    params = init_params(kp, LATENT, HIDDEN, OUT)

    out = jax.block_until_ready(decoder_forward(x, params))
    assert out.shape == (B, OUT), out.shape

    # (1) Strict check: JAX reference with identical numerics (bf16 matmuls,
    #     fused BN) — differences are reduction-order only.
    ref_m = decoder_ref_matched(x, params)
    err_m = float(jnp.max(jnp.abs(out - ref_m)))
    assert err_m < 1e-3, err_m

    # (2) Sanity check vs the faithful full-f32 PyTorch-semantics reference;
    #     the residual is bf16-matmul precision (b1/b2 cancel exactly).
    ref_f = decoder_ref_pytorch(x, params)
    err_f = float(jnp.max(jnp.abs(out - ref_f)))
    rel = float(jnp.linalg.norm(out - ref_f) / jnp.linalg.norm(ref_f))
    assert err_f < 0.1 and rel < 0.05, (err_f, rel)

    print("KERNEL_OK")
</pallas_src>

<mosaic_0001>
module attributes {stable_mosaic.version = 11 : i64} {
  func.func @decoder_kernel(%arg0: memref<128x8xf32, #tpu.memory_space<vmem>>, %arg1: memref<8x32xbf16, #tpu.memory_space<vmem>>, %arg2: memref<32x32xbf16, #tpu.memory_space<vmem>>, %arg3: memref<32x784xbf16, #tpu.memory_space<vmem>>, %arg4: memref<1x784xf32, #tpu.memory_space<vmem>>, %arg5: memref<4x32xf32, #tpu.memory_space<vmem>>, %arg6: memref<128x784xf32, #tpu.memory_space<vmem>>) attributes {dimension_semantics = [], scalar_prefetch = 0 : i64, scratch_operands = 0 : i64, tpu.core_type = #tpu.core_type<tc>} {
    %c0 = arith.constant 0 : index
    %c0_0 = arith.constant 0 : index
    %0 = vector.load %arg5[%c0, %c0_0] : memref<4x32xf32, #tpu.memory_space<vmem>>, vector<4x32xf32>
    %1 = vector.extract_strided_slice %0 {offsets = [0, 0], sizes = [1, 32], strides = [1, 1]} : vector<4x32xf32> to vector<1x32xf32>
    %2 = vector.extract_strided_slice %0 {offsets = [1, 0], sizes = [1, 32], strides = [1, 1]} : vector<4x32xf32> to vector<1x32xf32>
    %3 = vector.extract_strided_slice %0 {offsets = [2, 0], sizes = [1, 32], strides = [1, 1]} : vector<4x32xf32> to vector<1x32xf32>
    %4 = vector.extract_strided_slice %0 {offsets = [3, 0], sizes = [1, 32], strides = [1, 1]} : vector<4x32xf32> to vector<1x32xf32>
    %c0_1 = arith.constant 0 : index
    %c0_2 = arith.constant 0 : index
    %5 = vector.load %arg0[%c0_1, %c0_2] : memref<128x8xf32, #tpu.memory_space<vmem>>, vector<128x8xf32>
    %6 = arith.truncf %5 : vector<128x8xf32> to vector<128x8xbf16>
    %c0_3 = arith.constant 0 : index
    %c0_4 = arith.constant 0 : index
    %7 = vector.load %arg1[%c0_3, %c0_4] : memref<8x32xbf16, #tpu.memory_space<vmem>>, vector<8x32xbf16>
    %cst = arith.constant dense<0.000000e+00> : vector<128x32xf32>
    %8 = tpu.matmul %6, %7, %cst {dimension_numbers = #tpu.dot_dimension_numbers<[1], [0], [0], [1], [0, 0, 1, 1], [], []>} : vector<128x8xbf16>, vector<8x32xbf16>, vector<128x32xf32> -> vector<128x32xf32>
    %cst_5 = arith.constant dense<0.000000e+00> : vector<32xf32>
    %9 = vector.multi_reduction <add>, %8, %cst_5 [0] : vector<128x32xf32> to vector<32xf32>
    %10 = vector.shape_cast %9 : vector<32xf32> to vector<1x32xf32>
    %11 = arith.mulf %8, %8 : vector<128x32xf32>
    %cst_6 = arith.constant dense<0.000000e+00> : vector<32xf32>
    %12 = vector.multi_reduction <add>, %11, %cst_6 [0] : vector<128x32xf32> to vector<32xf32>
    %13 = vector.shape_cast %12 : vector<32xf32> to vector<1x32xf32>
    %cst_7 = arith.constant 7.812500e-03 : f32
    %14 = vector.broadcast %cst_7 : f32 to vector<1x32xf32>
    %15 = arith.mulf %10, %14 : vector<1x32xf32>
    %cst_8 = arith.constant 7.812500e-03 : f32
    %16 = vector.broadcast %cst_8 : f32 to vector<1x32xf32>
    %17 = arith.mulf %13, %16 : vector<1x32xf32>
    %18 = arith.mulf %15, %15 : vector<1x32xf32>
    %19 = arith.subf %17, %18 : vector<1x32xf32>
    %cst_9 = arith.constant 9.99999974E-6 : f32
    %20 = vector.broadcast %cst_9 : f32 to vector<1x32xf32>
    %21 = arith.addf %19, %20 : vector<1x32xf32>
    %22 = math.rsqrt %21 : vector<1x32xf32>
    %23 = arith.mulf %1, %22 : vector<1x32xf32>
    %24 = arith.mulf %15, %23 : vector<1x32xf32>
    %25 = arith.subf %2, %24 : vector<1x32xf32>
    %26 = vector.broadcast %23 : vector<1x32xf32> to vector<128x32xf32>
    %27 = arith.mulf %8, %26 : vector<128x32xf32>
    %28 = vector.broadcast %25 : vector<1x32xf32> to vector<128x32xf32>
    %29 = arith.addf %27, %28 : vector<128x32xf32>
    %cst_10 = arith.constant 0.000000e+00 : f32
    %30 = vector.broadcast %cst_10 : f32 to vector<128x32xf32>
    %31 = arith.maximumf %29, %30 : vector<128x32xf32>
    %32 = arith.truncf %31 : vector<128x32xf32> to vector<128x32xbf16>
    %c0_11 = arith.constant 0 : index
    %c0_12 = arith.constant 0 : index
    %33 = vector.load %arg2[%c0_11, %c0_12] : memref<32x32xbf16, #tpu.memory_space<vmem>>, vector<32x32xbf16>
    %cst_13 = arith.constant dense<0.000000e+00> : vector<128x32xf32>
    %34 = tpu.matmul %32, %33, %cst_13 {dimension_numbers = #tpu.dot_dimension_numbers<[1], [0], [0], [1], [0, 0, 1, 1], [], []>} : vector<128x32xbf16>, vector<32x32xbf16>, vector<128x32xf32> -> vector<128x32xf32>
    %cst_14 = arith.constant dense<0.000000e+00> : vector<32xf32>
    %35 = vector.multi_reduction <add>, %34, %cst_14 [0] : vector<128x32xf32> to vector<32xf32>
    %36 = vector.shape_cast %35 : vector<32xf32> to vector<1x32xf32>
    %37 = arith.mulf %34, %34 : vector<128x32xf32>
    %cst_15 = arith.constant dense<0.000000e+00> : vector<32xf32>
    %38 = vector.multi_reduction <add>, %37, %cst_15 [0] : vector<128x32xf32> to vector<32xf32>
    %39 = vector.shape_cast %38 : vector<32xf32> to vector<1x32xf32>
    %cst_16 = arith.constant 7.812500e-03 : f32
    %40 = vector.broadcast %cst_16 : f32 to vector<1x32xf32>
    %41 = arith.mulf %36, %40 : vector<1x32xf32>
    %cst_17 = arith.constant 7.812500e-03 : f32
    %42 = vector.broadcast %cst_17 : f32 to vector<1x32xf32>
    %43 = arith.mulf %39, %42 : vector<1x32xf32>
    %44 = arith.mulf %41, %41 : vector<1x32xf32>
    %45 = arith.subf %43, %44 : vector<1x32xf32>
    %cst_18 = arith.constant 9.99999974E-6 : f32
    %46 = vector.broadcast %cst_18 : f32 to vector<1x32xf32>
    %47 = arith.addf %45, %46 : vector<1x32xf32>
    %48 = math.rsqrt %47 : vector<1x32xf32>
    %49 = arith.mulf %3, %48 : vector<1x32xf32>
    %50 = arith.mulf %41, %49 : vector<1x32xf32>
    %51 = arith.subf %4, %50 : vector<1x32xf32>
    %52 = vector.broadcast %49 : vector<1x32xf32> to vector<128x32xf32>
    %53 = arith.mulf %34, %52 : vector<128x32xf32>
    %54 = vector.broadcast %51 : vector<1x32xf32> to vector<128x32xf32>
    %55 = arith.addf %53, %54 : vector<128x32xf32>
    %cst_19 = arith.constant 0.000000e+00 : f32
    %56 = vector.broadcast %cst_19 : f32 to vector<128x32xf32>
    %57 = arith.maximumf %55, %56 : vector<128x32xf32>
    %58 = arith.truncf %57 : vector<128x32xf32> to vector<128x32xbf16>
    %c0_20 = arith.constant 0 : index
    %c0_21 = arith.constant 0 : index
    %59 = vector.load %arg3[%c0_20, %c0_21] : memref<32x784xbf16, #tpu.memory_space<vmem>>, vector<32x784xbf16>
    %cst_22 = arith.constant dense<0.000000e+00> : vector<128x784xf32>
    %60 = tpu.matmul %58, %59, %cst_22 {dimension_numbers = #tpu.dot_dimension_numbers<[1], [0], [0], [1], [0, 0, 1, 1], [], []>} : vector<128x32xbf16>, vector<32x784xbf16>, vector<128x784xf32> -> vector<128x784xf32>
    %c0_23 = arith.constant 0 : index
    %c0_24 = arith.constant 0 : index
    %61 = vector.load %arg4[%c0_23, %c0_24] : memref<1x784xf32, #tpu.memory_space<vmem>>, vector<1x784xf32>
    %62 = vector.broadcast %61 : vector<1x784xf32> to vector<128x784xf32>
    %63 = arith.addf %60, %62 : vector<128x784xf32>
    %c0_25 = arith.constant 0 : index
    %c0_26 = arith.constant 0 : index
    %64 = vector.load %arg6[%c0_25, %c0_26] : memref<128x784xf32, #tpu.memory_space<vmem>>, vector<128x784xf32>
    tpu.vector_store %arg6[%c0_25, %c0_26], %63 {strides = array<i32>} : memref<128x784xf32, #tpu.memory_space<vmem>>, vector<128x784xf32>,
    return
  }
}

</mosaic_0001>

<llo_original>
// kernel: tpu_custom_call.1
$region0: #{tpu_custom_call.1}
  #allocation0 [shape = 'u32[]', space=smem, size = 0x4, offset = 0x4, fixed_abs, tag = 'smem constant byte address 0x4 - core index']
  #allocation1 [shape = 'u32[72,128]{1,0:T(1,128)}', space=vmem, size = 0x9000, scoped, tag = 'internal scratch']
  %s0 = inlined_call_operand.vmem [shape: f32[128,8], index: 0, kind: input, shape index: {}]
  %s1 = inlined_call_operand.hbm [shape: bf16[8,32], index: 1, kind: input, shape index: {}]
  %s2 = inlined_call_operand.vmem [shape: bf16[32,32], index: 2, kind: input, shape index: {}]
  %s3 = inlined_call_operand.vmem [shape: bf16[32,784], index: 3, kind: input, shape index: {}]
  %s4 = inlined_call_operand.vmem [shape: f32[1,784], index: 4, kind: input, shape index: {}]
  %s5 = inlined_call_operand.vmem [shape: f32[4,32], index: 5, kind: input, shape index: {}]
  %s6 = inlined_call_operand.vmem [shape: f32[128,784], index: 6, kind: output, shape index: {}]
  %s7 = sld [smem:[#allocation0]]
  $region38: #{tpu_custom_call.1} parent=0
    _
  %s9 = ssub.s32 1, %s7
  %s10 = scalar_select 0, %s9, %s7
  $region1: #{tpu_custom_call.1} parent=0
    #allocation2 [shape = 'u8[2048]{0}', space=vmem, size = 0x800, scoped, tag = 'input window, operand 1, single buffered']
    #allocation3 [shape = 's32[1]{0}', space=sflag, size = 0x4, scoped, tag = 'scoped memory for tpu_custom_call.1']
    %11 = vsyncpa [#allocation3], 0
    // Predicated region
    $region2: #{tpu_custom_call.1} parent=1 // pred_check
      _
    $region3: #{tpu_custom_call.1} parent=1 // pred_check_branch
      %13 = sbr.rel (0) target = $region5
    $region4: #{tpu_custom_call.1} parent=1 // pred_region
      _
    $region5: #{tpu_custom_call.1} parent=1 // pred_fallthru
      _
    // Predicated region
    $region6: #{tpu_custom_call.1} parent=1 // pred_check
      _
    $region7: #{tpu_custom_call.1} parent=1 // pred_check_branch
      %15 = sbr.rel (0) target = $region9
    $region8: #{tpu_custom_call.1} parent=1 // pred_region
      %17 = vsyncadd [#allocation3], 0
      %s19 = sshll.u32 %s1, 4
      %s20 = int_to_ptr.hbm [resolvable:$true] %s19
      %s21 = sshll.u32 [#allocation2], 4
      %s22 = int_to_ptr.vmem [resolvable:$true] %s21
      %24 = dma.hbm_to_vmem [thread:$0]  %s20, 64, %s22, [#allocation3]
    $region9: #{tpu_custom_call.1} parent=1 // pred_fallthru
      _
    // Predicated region
    $region10: #{tpu_custom_call.1} parent=1 // pred_check
      _
    $region11: #{tpu_custom_call.1} parent=1 // pred_check_branch
      %26 = sbr.rel (0) target = $region13
    $region12: #{tpu_custom_call.1} parent=1 // pred_region
      _
    $region13: #{tpu_custom_call.1} parent=1 // pred_fallthru
      _
    // Predicated region
    $region14: #{tpu_custom_call.1} parent=1 // pred_check
      _
    $region15: #{tpu_custom_call.1} parent=1 // pred_check_branch
      %28 = sbr.rel (0) target = $region17
    $region16: #{tpu_custom_call.1} parent=1 // pred_region
      _
    $region17: #{tpu_custom_call.1} parent=1 // pred_fallthru
      _
    // Predicated region
    $region18: #{tpu_custom_call.1} parent=1 // pred_check
      _
    $region19: #{tpu_custom_call.1} parent=1 // pred_check_branch
      %30 = sbr.rel (0) target = $region21
    $region20: #{tpu_custom_call.1} parent=1 // pred_region
      _
    $region21: #{tpu_custom_call.1} parent=1 // pred_fallthru
      _
    // Predicated region
    $region22: #{tpu_custom_call.1} parent=1 // pred_check
      _
    $region23: #{tpu_custom_call.1} parent=1 // pred_check_branch
      %32 = sbr.rel (0) target = $region25
    $region24: #{tpu_custom_call.1} parent=1 // pred_region
      _
    $region25: #{tpu_custom_call.1} parent=1 // pred_fallthru
      _
    // Predicated region
    $region26: #{tpu_custom_call.1} parent=1 // pred_check
      _
    $region27: #{tpu_custom_call.1} parent=1 // pred_check_branch
      %34 = sbr.rel (0) target = $region29
    $region28: #{tpu_custom_call.1} parent=1 // pred_region
      %36 = dma.done [#allocation3], 64
    $region29: #{tpu_custom_call.1} parent=1 // pred_fallthru
      _
    %v38 = vld [vmem:[%s5] sm:$0xf]
    %v39 = vld [vmem:[%s0] sm:$0xff]
    %v40 = vld [vmem:[%s0 + $0x8] sm:$0xff]
    %v41 = vld [vmem:[%s0 + $0x10] sm:$0xff]
    %v42 = vld [vmem:[%s0 + $0x18] sm:$0xff]
    %v43 = vld [vmem:[%s0 + $0x20] sm:$0xff]
    %v44 = vld [vmem:[%s0 + $0x28] sm:$0xff]
    %v45 = vld [vmem:[%s0 + $0x30] sm:$0xff]
    %v46 = vld [vmem:[%s0 + $0x38] sm:$0xff]
    %v47 = vld [vmem:[%s0 + $0x40] sm:$0xff]
    %v48 = vld [vmem:[%s0 + $0x48] sm:$0xff]
    %v49 = vld [vmem:[%s0 + $0x50] sm:$0xff]
    %v50 = vld [vmem:[%s0 + $0x58] sm:$0xff]
    %v51 = vld [vmem:[%s0 + $0x60] sm:$0xff]
    %v52 = vld [vmem:[%s0 + $0x68] sm:$0xff]
    %v53 = vld [vmem:[%s0 + $0x70] sm:$0xff]
    %v54 = vld [vmem:[%s0 + $0x78] sm:$0xff]
    %v55 = vpack.c.bf16 %v40, %v39
    %v56 = vpack.c.bf16 %v42, %v41
    %v57 = vpack.c.bf16 %v44, %v43
    %v58 = vpack.c.bf16 %v46, %v45
    %v59 = vpack.c.bf16 %v48, %v47
    %v60 = vpack.c.bf16 %v50, %v49
    %v61 = vpack.c.bf16 %v52, %v51
    %v62 = vpack.c.bf16 %v54, %v53
    %v63 = vld [vmem:[#allocation2] sm:$0xf]
    %vm64 = vcmask 64512
    %v66 = vsel %vm64, %v55, 0
    %v69 = vsel %vm64, %v56, 0
    %v72 = vsel %vm64, %v57, 0
    %v75 = vsel %vm64, %v58, 0
    %v78 = vsel %vm64, %v59, 0
    %v81 = vsel %vm64, %v60, 0
    %v84 = vsel %vm64, %v61, 0
    %v87 = vsel %vm64, %v62, 0
    %vm89 = vcmask 1043456
    %v91 = vsel %vm89, %v63, 0
    %93 = vmatpush.bf16.msra.mxu0 0
    %94 = vmatpush.bf16.msra.mxu0 0
    %95 = vmatpush.bf16.msra.mxu0 0
    %96 = vmatpush.bf16.msra.mxu0 0
    %97 = vmatpush.bf16.msra.mxu0 0
    %98 = vmatpush.bf16.msra.mxu0 0
    %99 = vmatpush.bf16.msra.mxu0 0
    %100 = vmatpush.bf16.msra.mxu0 %v91
    %101 = vmatmul.bf16.gmra.mxu0 %v66
    %v102 = vpop.f32.mrf.mxu0
    %v103 = vadd.f32 0.0, %v102
    %v104 = vpop.f32.mrf.mxu0
    %v105 = vadd.f32 0.0, %v104
    %106 = vmatmul.bf16.gmra.mxu0 %v69
    %v107 = vpop.f32.mrf.mxu0
    %v108 = vadd.f32 0.0, %v107
    %v109 = vpop.f32.mrf.mxu0
    %v110 = vadd.f32 0.0, %v109
    %111 = vmatmul.bf16.gmra.mxu0 %v72
    %v112 = vpop.f32.mrf.mxu0
    %v113 = vadd.f32 0.0, %v112
    %v114 = vpop.f32.mrf.mxu0
    %v115 = vadd.f32 0.0, %v114
    %116 = vmatmul.bf16.gmra.mxu0 %v75
    %v117 = vpop.f32.mrf.mxu0
    %v118 = vadd.f32 0.0, %v117
    %v119 = vpop.f32.mrf.mxu0
    %v120 = vadd.f32 0.0, %v119
    %121 = vmatmul.bf16.gmra.mxu0 %v78
    %v122 = vpop.f32.mrf.mxu0
    %v123 = vadd.f32 0.0, %v122
    %v124 = vpop.f32.mrf.mxu0
    %v125 = vadd.f32 0.0, %v124
    %126 = vmatmul.bf16.gmra.mxu0 %v81
    %v127 = vpop.f32.mrf.mxu0
    %v128 = vadd.f32 0.0, %v127
    %v129 = vpop.f32.mrf.mxu0
    %v130 = vadd.f32 0.0, %v129
    %131 = vmatmul.bf16.gmra.mxu0 %v84
    %v132 = vpop.f32.mrf.mxu0
    %v133 = vadd.f32 0.0, %v132
    %v134 = vpop.f32.mrf.mxu0
    %v135 = vadd.f32 0.0, %v134
    %136 = vmatmul.bf16.gmra.mxu0 %v87
    %v137 = vpop.f32.mrf.mxu0
    %v138 = vadd.f32 0.0, %v137
    %v139 = vpop.f32.mrf.mxu0
    %v140 = vadd.f32 0.0, %v139
    %141 = vdwg.mxu0
    %vm142 = vcmask 261120
    %v143 = vsel %vm142, %v103, 0.0
    %v144 = vsel %vm142, %v105, 0.0
    %v145 = vadd.f32 %v143, %v144
    %v146 = vsel %vm142, %v108, 0.0
    %v147 = vadd.f32 %v145, %v146
    %v148 = vsel %vm142, %v110, 0.0
    %v149 = vadd.f32 %v147, %v148
    %v150 = vsel %vm142, %v113, 0.0
    %v151 = vadd.f32 %v149, %v150
    %v152 = vsel %vm142, %v115, 0.0
    %v153 = vadd.f32 %v151, %v152
    %v154 = vsel %vm142, %v118, 0.0
    %v155 = vadd.f32 %v153, %v154
    %v156 = vsel %vm142, %v120, 0.0
    %v157 = vadd.f32 %v155, %v156
    %v158 = vsel %vm142, %v123, 0.0
    %v159 = vadd.f32 %v157, %v158
    %v160 = vsel %vm142, %v125, 0.0
    %v161 = vadd.f32 %v159, %v160
    %v162 = vsel %vm142, %v128, 0.0
    %v163 = vadd.f32 %v161, %v162
    %v164 = vsel %vm142, %v130, 0.0
    %v165 = vadd.f32 %v163, %v164
    %v166 = vsel %vm142, %v133, 0.0
    %v167 = vadd.f32 %v165, %v166
    %v168 = vsel %vm142, %v135, 0.0
    %v169 = vadd.f32 %v167, %v168
    %v170 = vsel %vm142, %v138, 0.0
    %v171 = vadd.f32 %v169, %v170
    %v172 = vsel %vm142, %v140, 0.0
    %v173 = vadd.f32 %v171, %v172
    %v174 = vrot.slane %v173, 4
    %v175 = vadd.f32 %v173, %v174
    %v176 = vrot.slane %v175, 2
    %v177 = vadd.f32 %v175, %v176
    %v178 = vrot.slane %v177, 1
    %v179 = vadd.f32 %v177, %v178
    %v180 = vmul.f32 %v103, %v103
    %v181 = vmul.f32 %v105, %v105
    %v182 = vmul.f32 %v108, %v108
    %v183 = vmul.f32 %v110, %v110
    %v184 = vmul.f32 %v113, %v113
    %v185 = vmul.f32 %v115, %v115
    %v186 = vmul.f32 %v118, %v118
    %v187 = vmul.f32 %v120, %v120
    %v188 = vmul.f32 %v123, %v123
    %v189 = vmul.f32 %v125, %v125
    %v190 = vmul.f32 %v128, %v128
    %v191 = vmul.f32 %v130, %v130
    %v192 = vmul.f32 %v133, %v133
    %v193 = vmul.f32 %v135, %v135
    %v194 = vmul.f32 %v138, %v138
    %v195 = vmul.f32 %v140, %v140
    %v196 = vsel %vm142, %v180, 0.0
    %v197 = vsel %vm142, %v181, 0.0
    %v198 = vadd.f32 %v196, %v197
    %v199 = vsel %vm142, %v182, 0.0
    %v200 = vadd.f32 %v198, %v199
    %v201 = vsel %vm142, %v183, 0.0
    %v202 = vadd.f32 %v200, %v201
    %v203 = vsel %vm142, %v184, 0.0
    %v204 = vadd.f32 %v202, %v203
    %v205 = vsel %vm142, %v185, 0.0
    %v206 = vadd.f32 %v204, %v205
    %v207 = vsel %vm142, %v186, 0.0
    %v208 = vadd.f32 %v206, %v207
    %v209 = vsel %vm142, %v187, 0.0
    %v210 = vadd.f32 %v208, %v209
    %v211 = vsel %vm142, %v188, 0.0
    %v212 = vadd.f32 %v210, %v211
    %v213 = vsel %vm142, %v189, 0.0
    %v214 = vadd.f32 %v212, %v213
    %v215 = vsel %vm142, %v190, 0.0
    %v216 = vadd.f32 %v214, %v215
    %v217 = vsel %vm142, %v191, 0.0
    %v218 = vadd.f32 %v216, %v217
    %v219 = vsel %vm142, %v192, 0.0
    %v220 = vadd.f32 %v218, %v219
    %v221 = vsel %vm142, %v193, 0.0
    %v222 = vadd.f32 %v220, %v221
    %v223 = vsel %vm142, %v194, 0.0
    %v224 = vadd.f32 %v222, %v223
    %v225 = vsel %vm142, %v195, 0.0
    %v226 = vadd.f32 %v224, %v225
    %v227 = vrot.slane %v226, 4
    %v228 = vadd.f32 %v226, %v227
    %v229 = vrot.slane %v228, 2
    %v230 = vadd.f32 %v228, %v229
    %v231 = vrot.slane %v230, 1
    %v232 = vadd.f32 %v230, %v231
    %v233 = vmul.f32 %v179, 0.0078125
    %v234 = vmul.f32 %v232, 0.0078125
    %v235 = vmul.f32 %v233, %v233
    %v236 = vsub.f32 %v234, %v235
    %v237 = vadd.f32 %v236, 1e-05
    %v238 = vrsqrt.pop %v237
    %v239 = vmul.f32 %v238, %v237
    %v240 = vmul.f32 %v239, %v238
    %v241 = vmul.f32 0.5, %v240
    %v242 = vsub.f32 1.5, %v241
    %v243 = vmul.f32 %v238, %v242
    %vm244 = vweird.f32 %v237
    %vm245 = vweird.f32 %v238
    %vm246 = vmor %vm244, %vm245
    %v247 = vsel %vm246, %v238, %v243
    %v248 = vmul.f32 %v38, %v247
    %v249 = vmul.f32 %v233, %v248
    %v251 = vrot.slane %v249, 7
    %v253 = vsub.f32 %v38, %v251
    %v254 = vperm.slane %v248, 0
    %v255 = vmul.f32 %v103, %v254
    %v256 = vmul.f32 %v105, %v254
    %v257 = vmul.f32 %v108, %v254
    %v258 = vmul.f32 %v110, %v254
    %v259 = vmul.f32 %v113, %v254
    %v260 = vmul.f32 %v115, %v254
    %v261 = vmul.f32 %v118, %v254
    %v262 = vmul.f32 %v120, %v254
    %v263 = vmul.f32 %v123, %v254
    %v264 = vmul.f32 %v125, %v254
    %v265 = vmul.f32 %v128, %v254
    %v266 = vmul.f32 %v130, %v254
    %v267 = vmul.f32 %v133, %v254
    %v268 = vmul.f32 %v135, %v254
    %v269 = vmul.f32 %v138, %v254
    %v270 = vmul.f32 %v140, %v254
    %v271 = vperm.slane %v253, 1
    %v272 = vadd.f32 %v255, %v271
    %v273 = vadd.f32 %v256, %v271
    %v274 = vadd.f32 %v257, %v271
    %v275 = vadd.f32 %v258, %v271
    %v276 = vadd.f32 %v259, %v271
    %v277 = vadd.f32 %v260, %v271
    %v278 = vadd.f32 %v261, %v271
    %v279 = vadd.f32 %v262, %v271
    %v280 = vadd.f32 %v263, %v271
    %v281 = vadd.f32 %v264, %v271
    %v282 = vadd.f32 %v265, %v271
    %v283 = vadd.f32 %v266, %v271
    %v284 = vadd.f32 %v267, %v271
    %v285 = vadd.f32 %v268, %v271
    %v286 = vadd.f32 %v269, %v271
    %v287 = vadd.f32 %v270, %v271
    %v288 = vmax.f32 %v272, 0.0
    %v289 = vmax.f32 %v273, 0.0
    %v290 = vmax.f32 %v274, 0.0
    %v291 = vmax.f32 %v275, 0.0
    %v292 = vmax.f32 %v276, 0.0
    %v293 = vmax.f32 %v277, 0.0
    %v294 = vmax.f32 %v278, 0.0
    %v295 = vmax.f32 %v279, 0.0
    %v296 = vmax.f32 %v280, 0.0
    %v297 = vmax.f32 %v281, 0.0
    %v298 = vmax.f32 %v282, 0.0
    %v299 = vmax.f32 %v283, 0.0
    %v300 = vmax.f32 %v284, 0.0
    %v301 = vmax.f32 %v285, 0.0
    %v302 = vmax.f32 %v286, 0.0
    %v303 = vmax.f32 %v287, 0.0
    %v304 = vpack.c.bf16 %v289, %v288
    %v305 = vpack.c.bf16 %v291, %v290
    %v306 = vpack.c.bf16 %v293, %v292
    %v307 = vpack.c.bf16 %v295, %v294
    %v308 = vpack.c.bf16 %v297, %v296
    %v309 = vpack.c.bf16 %v299, %v298
    %v310 = vpack.c.bf16 %v301, %v300
    %v311 = vpack.c.bf16 %v303, %v302
    %v312 = vld [vmem:[%s2] sm:$0xf]
    %v313 = vld [vmem:[%s2 + $0x4] sm:$0xf]
    %v314 = vld [vmem:[%s2 + $0x8] sm:$0xf]
    %v315 = vld [vmem:[%s2 + $0xc] sm:$0xf]
    %v320 = vunpack.c.l.b16 %v312
    %v321 = vunpack.c.l.b16 %v313
    %v322 = vunpack.c.l.b16 %v314
    %v323 = vunpack.c.l.b16 %v315
    %v324 = vpack.c.b16 %v321, %v320
    %v325 = vpack.c.b16 %v323, %v322
    %v329 = vsel %vm142, %v304, 0
    %v332 = vsel %vm142, %v305, 0
    %v335 = vsel %vm142, %v306, 0
    %v338 = vsel %vm142, %v307, 0
    %v341 = vsel %vm142, %v308, 0
    %v344 = vsel %vm142, %v309, 0
    %v347 = vsel %vm142, %v310, 0
    %v350 = vsel %vm142, %v311, 0
    %352 = vmatpush.bf16.msra.mxu0 0
    %353 = vmatpush.bf16.msra.mxu0 0
    %354 = vmatpush.bf16.msra.mxu0 0
    %355 = vmatpush.bf16.msra.mxu0 0
    %356 = vmatpush.bf16.msra.mxu0 0
    %357 = vmatpush.bf16.msra.mxu0 0
    %358 = vmatpush.bf16.msra.mxu0 %v325
    %359 = vmatpush.bf16.msra.mxu0 %v324
    %360 = vmatmul.bf16.gmra.mxu0 %v329
    %v361 = vpop.f32.mrf.mxu0
    %v362 = vadd.f32 0.0, %v361
    %v363 = vpop.f32.mrf.mxu0
    %v364 = vadd.f32 0.0, %v363
    %365 = vmatmul.bf16.gmra.mxu0 %v332
    %v366 = vpop.f32.mrf.mxu0
    %v367 = vadd.f32 0.0, %v366
    %v368 = vpop.f32.mrf.mxu0
    %v369 = vadd.f32 0.0, %v368
    %370 = vmatmul.bf16.gmra.mxu0 %v335
    %v371 = vpop.f32.mrf.mxu0
    %v372 = vadd.f32 0.0, %v371
    %v373 = vpop.f32.mrf.mxu0
    %v374 = vadd.f32 0.0, %v373
    %375 = vmatmul.bf16.gmra.mxu0 %v338
    %v376 = vpop.f32.mrf.mxu0
    %v377 = vadd.f32 0.0, %v376
    %v378 = vpop.f32.mrf.mxu0
    %v379 = vadd.f32 0.0, %v378
    %380 = vmatmul.bf16.gmra.mxu0 %v341
    %v381 = vpop.f32.mrf.mxu0
    %v382 = vadd.f32 0.0, %v381
    %v383 = vpop.f32.mrf.mxu0
    %v384 = vadd.f32 0.0, %v383
    %385 = vmatmul.bf16.gmra.mxu0 %v344
    %v386 = vpop.f32.mrf.mxu0
    %v387 = vadd.f32 0.0, %v386
    %v388 = vpop.f32.mrf.mxu0
    %v389 = vadd.f32 0.0, %v388
    %390 = vmatmul.bf16.gmra.mxu0 %v347
    %v391 = vpop.f32.mrf.mxu0
    %v392 = vadd.f32 0.0, %v391
    %v393 = vpop.f32.mrf.mxu0
    %v394 = vadd.f32 0.0, %v393
    %395 = vmatmul.bf16.gmra.mxu0 %v350
    %v396 = vpop.f32.mrf.mxu0
    %v397 = vadd.f32 0.0, %v396
    %v398 = vpop.f32.mrf.mxu0
    %v399 = vadd.f32 0.0, %v398
    %400 = vdwg.mxu0
    %v401 = vsel %vm142, %v362, 0.0
    %v402 = vsel %vm142, %v364, 0.0
    %v403 = vadd.f32 %v401, %v402
    %v404 = vsel %vm142, %v367, 0.0
    %v405 = vadd.f32 %v403, %v404
    %v406 = vsel %vm142, %v369, 0.0
    %v407 = vadd.f32 %v405, %v406
    %v408 = vsel %vm142, %v372, 0.0
    %v409 = vadd.f32 %v407, %v408
    %v410 = vsel %vm142, %v374, 0.0
    %v411 = vadd.f32 %v409, %v410
    %v412 = vsel %vm142, %v377, 0.0
    %v413 = vadd.f32 %v411, %v412
    %v414 = vsel %vm142, %v379, 0.0
    %v415 = vadd.f32 %v413, %v414
    %v416 = vsel %vm142, %v382, 0.0
    %v417 = vadd.f32 %v415, %v416
    %v418 = vsel %vm142, %v384, 0.0
    %v419 = vadd.f32 %v417, %v418
    %v420 = vsel %vm142, %v387, 0.0
    %v421 = vadd.f32 %v419, %v420
    %v422 = vsel %vm142, %v389, 0.0
    %v423 = vadd.f32 %v421, %v422
    %v424 = vsel %vm142, %v392, 0.0
    %v425 = vadd.f32 %v423, %v424
    %v426 = vsel %vm142, %v394, 0.0
    %v427 = vadd.f32 %v425, %v426
    %v428 = vsel %vm142, %v397, 0.0
    %v429 = vadd.f32 %v427, %v428
    %v430 = vsel %vm142, %v399, 0.0
    %v431 = vadd.f32 %v429, %v430
    %v432 = vrot.slane %v431, 4
    %v433 = vadd.f32 %v431, %v432
    %v434 = vrot.slane %v433, 2
    %v435 = vadd.f32 %v433, %v434
    %v436 = vrot.slane %v435, 1
    %v437 = vadd.f32 %v435, %v436
    %v438 = vmul.f32 %v362, %v362
    %v439 = vmul.f32 %v364, %v364
    %v440 = vmul.f32 %v367, %v367
    %v441 = vmul.f32 %v369, %v369
    %v442 = vmul.f32 %v372, %v372
    %v443 = vmul.f32 %v374, %v374
    %v444 = vmul.f32 %v377, %v377
    %v445 = vmul.f32 %v379, %v379
    %v446 = vmul.f32 %v382, %v382
    %v447 = vmul.f32 %v384, %v384
    %v448 = vmul.f32 %v387, %v387
    %v449 = vmul.f32 %v389, %v389
    %v450 = vmul.f32 %v392, %v392
    %v451 = vmul.f32 %v394, %v394
    %v452 = vmul.f32 %v397, %v397
    %v453 = vmul.f32 %v399, %v399
    %v454 = vsel %vm142, %v438, 0.0
    %v455 = vsel %vm142, %v439, 0.0
    %v456 = vadd.f32 %v454, %v455
    %v457 = vsel %vm142, %v440, 0.0
    %v458 = vadd.f32 %v456, %v457
    %v459 = vsel %vm142, %v441, 0.0
    %v460 = vadd.f32 %v458, %v459
    %v461 = vsel %vm142, %v442, 0.0
    %v462 = vadd.f32 %v460, %v461
    %v463 = vsel %vm142, %v443, 0.0
    %v464 = vadd.f32 %v462, %v463
    %v465 = vsel %vm142, %v444, 0.0
    %v466 = vadd.f32 %v464, %v465
    %v467 = vsel %vm142, %v445, 0.0
    %v468 = vadd.f32 %v466, %v467
    %v469 = vsel %vm142, %v446, 0.0
    %v470 = vadd.f32 %v468, %v469
    %v471 = vsel %vm142, %v447, 0.0
    %v472 = vadd.f32 %v470, %v471
    %v473 = vsel %vm142, %v448, 0.0
    %v474 = vadd.f32 %v472, %v473
    %v475 = vsel %vm142, %v449, 0.0
    %v476 = vadd.f32 %v474, %v475
    %v477 = vsel %vm142, %v450, 0.0
    %v478 = vadd.f32 %v476, %v477
    %v479 = vsel %vm142, %v451, 0.0
    %v480 = vadd.f32 %v478, %v479
    %v481 = vsel %vm142, %v452, 0.0
    %v482 = vadd.f32 %v480, %v481
    %v483 = vsel %vm142, %v453, 0.0
    %v484 = vadd.f32 %v482, %v483
    %v485 = vrot.slane %v484, 4
    %v486 = vadd.f32 %v484, %v485
    %v487 = vrot.slane %v486, 2
    %v488 = vadd.f32 %v486, %v487
    %v489 = vrot.slane %v488, 1
    %v490 = vadd.f32 %v488, %v489
    %v491 = vmul.f32 %v437, 0.0078125
    %v492 = vmul.f32 %v490, 0.0078125
    %v493 = vmul.f32 %v491, %v491
    %v494 = vsub.f32 %v492, %v493
    %v495 = vadd.f32 %v494, 1e-05
    %v496 = vrsqrt.pop %v495
    %v497 = vmul.f32 %v496, %v495
    %v498 = vmul.f32 %v497, %v496
    %v499 = vmul.f32 0.5, %v498
    %v500 = vsub.f32 1.5, %v499
    %v501 = vmul.f32 %v496, %v500
    %vm502 = vweird.f32 %v495
    %vm503 = vweird.f32 %v496
    %vm504 = vmor %vm502, %vm503
    %v505 = vsel %vm504, %v496, %v501
    %v506 = vmul.f32 %v38, %v505
    %v507 = vmul.f32 %v491, %v506
    %v509 = vrot.slane %v507, 7
    %v511 = vsub.f32 %v38, %v509
    %v512 = vperm.slane %v506, 2
    %v513 = vmul.f32 %v362, %v512
    %v514 = vmul.f32 %v364, %v512
    %v515 = vmul.f32 %v367, %v512
    %v516 = vmul.f32 %v369, %v512
    %v517 = vmul.f32 %v372, %v512
    %v518 = vmul.f32 %v374, %v512
    %v519 = vmul.f32 %v377, %v512
    %v520 = vmul.f32 %v379, %v512
    %v521 = vmul.f32 %v382, %v512
    %v522 = vmul.f32 %v384, %v512
    %v523 = vmul.f32 %v387, %v512
    %v524 = vmul.f32 %v389, %v512
    %v525 = vmul.f32 %v392, %v512
    %v526 = vmul.f32 %v394, %v512
    %v527 = vmul.f32 %v397, %v512
    %v528 = vmul.f32 %v399, %v512
    %v529 = vperm.slane %v511, 3
    %v530 = vadd.f32 %v513, %v529
    %v531 = vadd.f32 %v514, %v529
    %v532 = vadd.f32 %v515, %v529
    %v533 = vadd.f32 %v516, %v529
    %v534 = vadd.f32 %v517, %v529
    %v535 = vadd.f32 %v518, %v529
    %v536 = vadd.f32 %v519, %v529
    %v537 = vadd.f32 %v520, %v529
    %v538 = vadd.f32 %v521, %v529
    %v539 = vadd.f32 %v522, %v529
    %v540 = vadd.f32 %v523, %v529
    %v541 = vadd.f32 %v524, %v529
    %v542 = vadd.f32 %v525, %v529
    %v543 = vadd.f32 %v526, %v529
    %v544 = vadd.f32 %v527, %v529
    %v545 = vadd.f32 %v528, %v529
    %v546 = vmax.f32 %v530, 0.0
    %v547 = vmax.f32 %v531, 0.0
    %v548 = vmax.f32 %v532, 0.0
    %v549 = vmax.f32 %v533, 0.0
    %v550 = vmax.f32 %v534, 0.0
    %v551 = vmax.f32 %v535, 0.0
    %v552 = vmax.f32 %v536, 0.0
    %v553 = vmax.f32 %v537, 0.0
    %v554 = vmax.f32 %v538, 0.0
    %v555 = vmax.f32 %v539, 0.0
    %v556 = vmax.f32 %v540, 0.0
    %v557 = vmax.f32 %v541, 0.0
    %v558 = vmax.f32 %v542, 0.0
    %v559 = vmax.f32 %v543, 0.0
    %v560 = vmax.f32 %v544, 0.0
    %v561 = vmax.f32 %v545, 0.0
    %v562 = vpack.c.bf16 %v547, %v546
    %v563 = vpack.c.bf16 %v549, %v548
    %v564 = vpack.c.bf16 %v551, %v550
    %v565 = vpack.c.bf16 %v553, %v552
    %v566 = vpack.c.bf16 %v555, %v554
    %v567 = vpack.c.bf16 %v557, %v556
    %v568 = vpack.c.bf16 %v559, %v558
    %v569 = vpack.c.bf16 %v561, %v560
    %v570 = vld [vmem:[%s3] sm:$0xff]
    %v571 = vld [vmem:[%s3 + $0x8] sm:$0xff]
    %v572 = vld [vmem:[%s3 + $0x10] sm:$0xff]
    %v573 = vld [vmem:[%s3 + $0x18] sm:$0xf]
    %v574 = vld [vmem:[%s3 + $0x1c] sm:$0xff]
    %v575 = vld [vmem:[%s3 + $0x24] sm:$0xff]
    %v576 = vld [vmem:[%s3 + $0x2c] sm:$0xff]
    %v577 = vld [vmem:[%s3 + $0x34] sm:$0xf]
    %v578 = vld [vmem:[%s3 + $0x38] sm:$0xff]
    %v579 = vld [vmem:[%s3 + $0x40] sm:$0xff]
    %v580 = vld [vmem:[%s3 + $0x48] sm:$0xff]
    %v581 = vld [vmem:[%s3 + $0x50] sm:$0xf]
    %v582 = vld [vmem:[%s3 + $0x54] sm:$0xff]
    %v583 = vld [vmem:[%s3 + $0x5c] sm:$0xff]
    %v584 = vld [vmem:[%s3 + $0x64] sm:$0xff]
    %v585 = vld [vmem:[%s3 + $0x6c] sm:$0xf]
    %v586 = vld [vmem:[%s4] sm:$0x7f]
    %v588 = vperm.slane %v586, 0
    %v589 = vperm.slane %v586, 1
    %v590 = vperm.slane %v586, 2
    %v591 = vperm.slane %v586, 3
    %v592 = vperm.slane %v586, 4
    %v593 = vperm.slane %v586, 5
    %v594 = vperm.slane %v586, 6
    %v618 = vunpack.c.l.b16 %v570
    %v619 = vunpack.c.h.b16 %v570
    %v620 = vunpack.c.l.b16 %v571
    %v621 = vunpack.c.h.b16 %v571
    %v622 = vunpack.c.l.b16 %v572
    %v623 = vunpack.c.h.b16 %v572
    %v624 = vunpack.c.l.b16 %v573
    %v625 = vunpack.c.l.b16 %v574
    %v626 = vunpack.c.h.b16 %v574
    %v627 = vunpack.c.l.b16 %v575
    %v628 = vunpack.c.h.b16 %v575
    %v629 = vunpack.c.l.b16 %v576
    %v630 = vunpack.c.h.b16 %v576
    %v631 = vunpack.c.l.b16 %v577
    %v632 = vunpack.c.l.b16 %v578
    %v633 = vunpack.c.h.b16 %v578
    %v634 = vunpack.c.l.b16 %v579
    %v635 = vunpack.c.h.b16 %v579
    %v636 = vunpack.c.l.b16 %v580
    %v637 = vunpack.c.h.b16 %v580
    %v638 = vunpack.c.l.b16 %v581
    %v639 = vunpack.c.l.b16 %v582
    %v640 = vunpack.c.h.b16 %v582
    %v641 = vunpack.c.l.b16 %v583
    %v642 = vunpack.c.h.b16 %v583
    %v643 = vunpack.c.l.b16 %v584
    %v644 = vunpack.c.h.b16 %v584
    %v645 = vunpack.c.l.b16 %v585
    %v646 = vpack.c.b16 %v625, %v618
    %v647 = vpack.c.b16 %v626, %v619
    %v648 = vpack.c.b16 %v627, %v620
    %v649 = vpack.c.b16 %v628, %v621
    %v650 = vpack.c.b16 %v629, %v622
    %v651 = vpack.c.b16 %v630, %v623
    %v652 = vpack.c.b16 %v631, %v624
    %v653 = vpack.c.b16 %v639, %v632
    %v654 = vpack.c.b16 %v640, %v633
    %v655 = vpack.c.b16 %v641, %v634
    %v656 = vpack.c.b16 %v642, %v635
    %v657 = vpack.c.b16 %v643, %v636
    %v658 = vpack.c.b16 %v644, %v637
    %v659 = vpack.c.b16 %v645, %v638
    %v675 = vsel %vm142, %v562, 0
    %v678 = vsel %vm142, %v563, 0
    %v681 = vsel %vm142, %v564, 0
    %v684 = vsel %vm142, %v565, 0
    %v687 = vsel %vm142, %v566, 0
    %v690 = vsel %vm142, %v567, 0
    %v693 = vsel %vm142, %v568, 0
    %v696 = vsel %vm142, %v569, 0
    %698 = vmatpush.bf16.msra.mxu0 0
    %699 = vmatpush.bf16.msra.mxu0 0
    %700 = vmatpush.bf16.msra.mxu0 0
    %701 = vmatpush.bf16.msra.mxu0 0
    %702 = vmatpush.bf16.msra.mxu0 0
    %703 = vmatpush.bf16.msra.mxu0 0
    %704 = vmatpush.bf16.msra.mxu0 %v653
    %705 = vmatpush.bf16.msra.mxu0 %v646
    %706 = vmatmul.bf16.gmra.mxu0 %v675
    %v707 = vpop.f32.mrf.mxu0
    %v708 = vadd.f32 %v588, %v707
    %v709 = vpop.f32.mrf.mxu0
    %v710 = vadd.f32 %v588, %v709
    %711 = vmatmul.bf16.gmra.mxu0 %v678
    %v712 = vpop.f32.mrf.mxu0
    %v713 = vadd.f32 %v588, %v712
    %v714 = vpop.f32.mrf.mxu0
    %v715 = vadd.f32 %v588, %v714
    %716 = vmatmul.bf16.gmra.mxu0 %v681
    %v717 = vpop.f32.mrf.mxu0
    %v718 = vadd.f32 %v588, %v717
    %v719 = vpop.f32.mrf.mxu0
    %v720 = vadd.f32 %v588, %v719
    %721 = vmatmul.bf16.gmra.mxu0 %v684
    %v722 = vpop.f32.mrf.mxu0
    %v723 = vadd.f32 %v588, %v722
    %v724 = vpop.f32.mrf.mxu0
    %v725 = vadd.f32 %v588, %v724
    %726 = vmatmul.bf16.gmra.mxu0 %v687
    %v727 = vpop.f32.mrf.mxu0
    %v728 = vadd.f32 %v588, %v727
    %v729 = vpop.f32.mrf.mxu0
    %v730 = vadd.f32 %v588, %v729
    %731 = vmatmul.bf16.gmra.mxu0 %v690
    %v732 = vpop.f32.mrf.mxu0
    %v733 = vadd.f32 %v588, %v732
    %v734 = vpop.f32.mrf.mxu0
    %v735 = vadd.f32 %v588, %v734
    %736 = vmatmul.bf16.gmra.mxu0 %v693
    %v737 = vpop.f32.mrf.mxu0
    %v738 = vadd.f32 %v588, %v737
    %v739 = vpop.f32.mrf.mxu0
    %v740 = vadd.f32 %v588, %v739
    %741 = vmatmul.bf16.gmra.mxu0 %v696
    %v742 = vpop.f32.mrf.mxu0
    %v743 = vadd.f32 %v588, %v742
    %v744 = vpop.f32.mrf.mxu0
    %v745 = vadd.f32 %v588, %v744
    %746 = vdwg.mxu0
    %747 = vmatpush.bf16.msra.mxu0 0
    %748 = vmatpush.bf16.msra.mxu0 0
    %749 = vmatpush.bf16.msra.mxu0 0
    %750 = vmatpush.bf16.msra.mxu0 0
    %751 = vmatpush.bf16.msra.mxu0 0
    %752 = vmatpush.bf16.msra.mxu0 0
    %753 = vmatpush.bf16.msra.mxu0 %v654
    %754 = vmatpush.bf16.msra.mxu0 %v647
    %755 = vmatmul.bf16.gmra.mxu0 %v675
    %v756 = vpop.f32.mrf.mxu0
    %v757 = vadd.f32 %v589, %v756
    %v758 = vpop.f32.mrf.mxu0
    %v759 = vadd.f32 %v589, %v758
    %760 = vmatmul.bf16.gmra.mxu0 %v678
    %v761 = vpop.f32.mrf.mxu0
    %v762 = vadd.f32 %v589, %v761
    %v763 = vpop.f32.mrf.mxu0
    %v764 = vadd.f32 %v589, %v763
    %765 = vmatmul.bf16.gmra.mxu0 %v681
    %v766 = vpop.f32.mrf.mxu0
    %v767 = vadd.f32 %v589, %v766
    %v768 = vpop.f32.mrf.mxu0
    %v769 = vadd.f32 %v589, %v768
    %770 = vmatmul.bf16.gmra.mxu0 %v684
    %v771 = vpop.f32.mrf.mxu0
    %v772 = vadd.f32 %v589, %v771
    %v773 = vpop.f32.mrf.mxu0
    %v774 = vadd.f32 %v589, %v773
    %775 = vmatmul.bf16.gmra.mxu0 %v687
    %v776 = vpop.f32.mrf.mxu0
    %v777 = vadd.f32 %v589, %v776
    %v778 = vpop.f32.mrf.mxu0
    %v779 = vadd.f32 %v589, %v778
    %780 = vmatmul.bf16.gmra.mxu0 %v690
    %v781 = vpop.f32.mrf.mxu0
    %v782 = vadd.f32 %v589, %v781
    %v783 = vpop.f32.mrf.mxu0
    %v784 = vadd.f32 %v589, %v783
    %785 = vmatmul.bf16.gmra.mxu0 %v693
    %v786 = vpop.f32.mrf.mxu0
    %v787 = vadd.f32 %v589, %v786
    %v788 = vpop.f32.mrf.mxu0
    %v789 = vadd.f32 %v589, %v788
    %790 = vmatmul.bf16.gmra.mxu0 %v696
    %v791 = vpop.f32.mrf.mxu0
    %v792 = vadd.f32 %v589, %v791
    %v793 = vpop.f32.mrf.mxu0
    %v794 = vadd.f32 %v589, %v793
    %795 = vdwg.mxu0
    %796 = vmatpush.bf16.msra.mxu0 0
    %797 = vmatpush.bf16.msra.mxu0 0
    %798 = vmatpush.bf16.msra.mxu0 0
    %799 = vmatpush.bf16.msra.mxu0 0
    %800 = vmatpush.bf16.msra.mxu0 0
    %801 = vmatpush.bf16.msra.mxu0 0
    %802 = vmatpush.bf16.msra.mxu0 %v655
    %803 = vmatpush.bf16.msra.mxu0 %v648
    %804 = vmatmul.bf16.gmra.mxu0 %v675
    %v805 = vpop.f32.mrf.mxu0
    %v806 = vadd.f32 %v590, %v805
    %v807 = vpop.f32.mrf.mxu0
    %v808 = vadd.f32 %v590, %v807
    %809 = vmatmul.bf16.gmra.mxu0 %v678
    %v810 = vpop.f32.mrf.mxu0
    %v811 = vadd.f32 %v590, %v810
    %v812 = vpop.f32.mrf.mxu0
    %v813 = vadd.f32 %v590, %v812
    %814 = vmatmul.bf16.gmra.mxu0 %v681
    %v815 = vpop.f32.mrf.mxu0
    %v816 = vadd.f32 %v590, %v815
    %v817 = vpop.f32.mrf.mxu0
    %v818 = vadd.f32 %v590, %v817
    %819 = vmatmul.bf16.gmra.mxu0 %v684
    %v820 = vpop.f32.mrf.mxu0
    %v821 = vadd.f32 %v590, %v820
    %v822 = vpop.f32.mrf.mxu0
    %v823 = vadd.f32 %v590, %v822
    %824 = vmatmul.bf16.gmra.mxu0 %v687
    %v825 = vpop.f32.mrf.mxu0
    %v826 = vadd.f32 %v590, %v825
    %v827 = vpop.f32.mrf.mxu0
    %v828 = vadd.f32 %v590, %v827
    %829 = vmatmul.bf16.gmra.mxu0 %v690
    %v830 = vpop.f32.mrf.mxu0
    %v831 = vadd.f32 %v590, %v830
    %v832 = vpop.f32.mrf.mxu0
    %v833 = vadd.f32 %v590, %v832
    %834 = vmatmul.bf16.gmra.mxu0 %v693
    %v835 = vpop.f32.mrf.mxu0
    %v836 = vadd.f32 %v590, %v835
    %v837 = vpop.f32.mrf.mxu0
    %v838 = vadd.f32 %v590, %v837
    %839 = vmatmul.bf16.gmra.mxu0 %v696
    %v840 = vpop.f32.mrf.mxu0
    %v841 = vadd.f32 %v590, %v840
    %v842 = vpop.f32.mrf.mxu0
    %v843 = vadd.f32 %v590, %v842
    %844 = vdwg.mxu0
    %845 = vmatpush.bf16.msra.mxu0 0
    %846 = vmatpush.bf16.msra.mxu0 0
    %847 = vmatpush.bf16.msra.mxu0 0
    %848 = vmatpush.bf16.msra.mxu0 0
    %849 = vmatpush.bf16.msra.mxu0 0
    %850 = vmatpush.bf16.msra.mxu0 0
    %851 = vmatpush.bf16.msra.mxu0 %v656
    %852 = vmatpush.bf16.msra.mxu0 %v649
    %853 = vmatmul.bf16.gmra.mxu0 %v675
    %v854 = vpop.f32.mrf.mxu0
    %v855 = vadd.f32 %v591, %v854
    %v856 = vpop.f32.mrf.mxu0
    %v857 = vadd.f32 %v591, %v856
    %858 = vmatmul.bf16.gmra.mxu0 %v678
    %v859 = vpop.f32.mrf.mxu0
    %v860 = vadd.f32 %v591, %v859
    %v861 = vpop.f32.mrf.mxu0
    %v862 = vadd.f32 %v591, %v861
    %863 = vmatmul.bf16.gmra.mxu0 %v681
    %v864 = vpop.f32.mrf.mxu0
    %v865 = vadd.f32 %v591, %v864
    %v866 = vpop.f32.mrf.mxu0
    %v867 = vadd.f32 %v591, %v866
    %868 = vmatmul.bf16.gmra.mxu0 %v684
    %v869 = vpop.f32.mrf.mxu0
    %v870 = vadd.f32 %v591, %v869
    %v871 = vpop.f32.mrf.mxu0
    %v872 = vadd.f32 %v591, %v871
    %873 = vmatmul.bf16.gmra.mxu0 %v687
    %v874 = vpop.f32.mrf.mxu0
    %v875 = vadd.f32 %v591, %v874
    %v876 = vpop.f32.mrf.mxu0
    %v877 = vadd.f32 %v591, %v876
    %878 = vmatmul.bf16.gmra.mxu0 %v690
    %v879 = vpop.f32.mrf.mxu0
    %v880 = vadd.f32 %v591, %v879
    %v881 = vpop.f32.mrf.mxu0
    %v882 = vadd.f32 %v591, %v881
    %883 = vmatmul.bf16.gmra.mxu0 %v693
    %v884 = vpop.f32.mrf.mxu0
    %v885 = vadd.f32 %v591, %v884
    %v886 = vpop.f32.mrf.mxu0
    %v887 = vadd.f32 %v591, %v886
    %888 = vmatmul.bf16.gmra.mxu0 %v696
    %v889 = vpop.f32.mrf.mxu0
    %v890 = vadd.f32 %v591, %v889
    %v891 = vpop.f32.mrf.mxu0
    %v892 = vadd.f32 %v591, %v891
    %893 = vdwg.mxu0
    %894 = vmatpush.bf16.msra.mxu0 0
    %895 = vmatpush.bf16.msra.mxu0 0
    %896 = vmatpush.bf16.msra.mxu0 0
    %897 = vmatpush.bf16.msra.mxu0 0
    %898 = vmatpush.bf16.msra.mxu0 0
    %899 = vmatpush.bf16.msra.mxu0 0
    %900 = vmatpush.bf16.msra.mxu0 %v657
    %901 = vmatpush.bf16.msra.mxu0 %v650
    %902 = vmatmul.bf16.gmra.mxu0 %v675
    %v903 = vpop.f32.mrf.mxu0
    %v904 = vadd.f32 %v592, %v903
    %v905 = vpop.f32.mrf.mxu0
    %v906 = vadd.f32 %v592, %v905
    %907 = vmatmul.bf16.gmra.mxu0 %v678
    %v908 = vpop.f32.mrf.mxu0
    %v909 = vadd.f32 %v592, %v908
    %v910 = vpop.f32.mrf.mxu0
    %v911 = vadd.f32 %v592, %v910
    %912 = vmatmul.bf16.gmra.mxu0 %v681
    %v913 = vpop.f32.mrf.mxu0
    %v914 = vadd.f32 %v592, %v913
    %v915 = vpop.f32.mrf.mxu0
    %v916 = vadd.f32 %v592, %v915
    %917 = vmatmul.bf16.gmra.mxu0 %v684
    %v918 = vpop.f32.mrf.mxu0
    %v919 = vadd.f32 %v592, %v918
    %v920 = vpop.f32.mrf.mxu0
    %v921 = vadd.f32 %v592, %v920
    %922 = vmatmul.bf16.gmra.mxu0 %v687
    %v923 = vpop.f32.mrf.mxu0
    %v924 = vadd.f32 %v592, %v923
    %v925 = vpop.f32.mrf.mxu0
    %v926 = vadd.f32 %v592, %v925
    %927 = vmatmul.bf16.gmra.mxu0 %v690
    %v928 = vpop.f32.mrf.mxu0
    %v929 = vadd.f32 %v592, %v928
    %v930 = vpop.f32.mrf.mxu0
    %v931 = vadd.f32 %v592, %v930
    %932 = vmatmul.bf16.gmra.mxu0 %v693
    %v933 = vpop.f32.mrf.mxu0
    %v934 = vadd.f32 %v592, %v933
    %v935 = vpop.f32.mrf.mxu0
    %v936 = vadd.f32 %v592, %v935
    %937 = vmatmul.bf16.gmra.mxu0 %v696
    %v938 = vpop.f32.mrf.mxu0
    %v939 = vadd.f32 %v592, %v938
    %v940 = vpop.f32.mrf.mxu0
    %v941 = vadd.f32 %v592, %v940
    %942 = vdwg.mxu0
    %943 = vmatpush.bf16.msra.mxu0 0
    %944 = vmatpush.bf16.msra.mxu0 0
    %945 = vmatpush.bf16.msra.mxu0 0
    %946 = vmatpush.bf16.msra.mxu0 0
    %947 = vmatpush.bf16.msra.mxu0 0
    %948 = vmatpush.bf16.msra.mxu0 0
    %949 = vmatpush.bf16.msra.mxu0 %v658
    %950 = vmatpush.bf16.msra.mxu0 %v651
    %951 = vmatmul.bf16.gmra.mxu0 %v675
    %v952 = vpop.f32.mrf.mxu0
    %v953 = vadd.f32 %v593, %v952
    %v954 = vpop.f32.mrf.mxu0
    %v955 = vadd.f32 %v593, %v954
    %956 = vmatmul.bf16.gmra.mxu0 %v678
    %v957 = vpop.f32.mrf.mxu0
    %v958 = vadd.f32 %v593, %v957
    %v959 = vpop.f32.mrf.mxu0
    %v960 = vadd.f32 %v593, %v959
    %961 = vmatmul.bf16.gmra.mxu0 %v681
    %v962 = vpop.f32.mrf.mxu0
    %v963 = vadd.f32 %v593, %v962
    %v964 = vpop.f32.mrf.mxu0
    %v965 = vadd.f32 %v593, %v964
    %966 = vmatmul.bf16.gmra.mxu0 %v684
    %v967 = vpop.f32.mrf.mxu0
    %v968 = vadd.f32 %v593, %v967
    %v969 = vpop.f32.mrf.mxu0
    %v970 = vadd.f32 %v593, %v969
    %971 = vmatmul.bf16.gmra.mxu0 %v687
    %v972 = vpop.f32.mrf.mxu0
    %v973 = vadd.f32 %v593, %v972
    %v974 = vpop.f32.mrf.mxu0
    %v975 = vadd.f32 %v593, %v974
    %976 = vmatmul.bf16.gmra.mxu0 %v690
    %v977 = vpop.f32.mrf.mxu0
    %v978 = vadd.f32 %v593, %v977
    %v979 = vpop.f32.mrf.mxu0
    %v980 = vadd.f32 %v593, %v979
    %981 = vmatmul.bf16.gmra.mxu0 %v693
    %v982 = vpop.f32.mrf.mxu0
    %v983 = vadd.f32 %v593, %v982
    %v984 = vpop.f32.mrf.mxu0
    %v985 = vadd.f32 %v593, %v984
    %986 = vmatmul.bf16.gmra.mxu0 %v696
    %v987 = vpop.f32.mrf.mxu0
    %v988 = vadd.f32 %v593, %v987
    %v989 = vpop.f32.mrf.mxu0
    %v990 = vadd.f32 %v593, %v989
    %991 = vdwg.mxu0
    %992 = vmatpush.bf16.msra.mxu0 0
    %993 = vmatpush.bf16.msra.mxu0 0
    %994 = vmatpush.bf16.msra.mxu0 0
    %995 = vmatpush.bf16.msra.mxu0 0
    %996 = vmatpush.bf16.msra.mxu0 0
    %997 = vmatpush.bf16.msra.mxu0 0
    %998 = vmatpush.bf16.msra.mxu0 %v659
    %999 = vmatpush.bf16.msra.mxu0 %v652
    %1000 = vmatmul.bf16.gmra.mxu0 %v675
    %v1001 = vpop.f32.mrf.mxu0
    %v1002 = vadd.f32 %v594, %v1001
    %v1003 = vpop.f32.mrf.mxu0
    %v1004 = vadd.f32 %v594, %v1003
    %1005 = vmatmul.bf16.gmra.mxu0 %v678
    %v1006 = vpop.f32.mrf.mxu0
    %v1007 = vadd.f32 %v594, %v1006
    %v1008 = vpop.f32.mrf.mxu0
    %v1009 = vadd.f32 %v594, %v1008
    %1010 = vmatmul.bf16.gmra.mxu0 %v681
    %v1011 = vpop.f32.mrf.mxu0
    %v1012 = vadd.f32 %v594, %v1011
    %v1013 = vpop.f32.mrf.mxu0
    %v1014 = vadd.f32 %v594, %v1013
    %1015 = vmatmul.bf16.gmra.mxu0 %v684
    %v1016 = vpop.f32.mrf.mxu0
    %v1017 = vadd.f32 %v594, %v1016
    %v1018 = vpop.f32.mrf.mxu0
    %v1019 = vadd.f32 %v594, %v1018
    %1020 = vmatmul.bf16.gmra.mxu0 %v687
    %v1021 = vpop.f32.mrf.mxu0
    %v1022 = vadd.f32 %v594, %v1021
    %v1023 = vpop.f32.mrf.mxu0
    %v1024 = vadd.f32 %v594, %v1023
    %1025 = vmatmul.bf16.gmra.mxu0 %v690
    %v1026 = vpop.f32.mrf.mxu0
    %v1027 = vadd.f32 %v594, %v1026
    %v1028 = vpop.f32.mrf.mxu0
    %v1029 = vadd.f32 %v594, %v1028
    %1030 = vmatmul.bf16.gmra.mxu0 %v693
    %v1031 = vpop.f32.mrf.mxu0
    %v1032 = vadd.f32 %v594, %v1031
    %v1033 = vpop.f32.mrf.mxu0
    %v1034 = vadd.f32 %v594, %v1033
    %1035 = vmatmul.bf16.gmra.mxu0 %v696
    %v1036 = vpop.f32.mrf.mxu0
    %v1037 = vadd.f32 %v594, %v1036
    %v1038 = vpop.f32.mrf.mxu0
    %v1039 = vadd.f32 %v594, %v1038
    %1040 = vdwg.mxu0
    %1041 = vst [vmem:[%s6] sm:$0xff] %v708
    %1042 = vst [vmem:[%s6 + $0x8] sm:$0xff] %v757
    %1043 = vst [vmem:[%s6 + $0x10] sm:$0xff] %v806
    %1044 = vst [vmem:[%s6 + $0x18] sm:$0xff] %v855
    %1045 = vst [vmem:[%s6 + $0x20] sm:$0xff] %v904
    %1046 = vst [vmem:[%s6 + $0x28] sm:$0xff] %v953
    %vm1047 = vcmask 130048
    %1048 = vst.msk [vmem:[%s6 + $0x30] sm:$0xff] %vm1047, %v1002
    %1049 = vst [vmem:[%s6 + $0x38] sm:$0xff] %v710
    %1050 = vst [vmem:[%s6 + $0x40] sm:$0xff] %v759
    %1051 = vst [vmem:[%s6 + $0x48] sm:$0xff] %v808
    %1052 = vst [vmem:[%s6 + $0x50] sm:$0xff] %v857
    %1053 = vst [vmem:[%s6 + $0x58] sm:$0xff] %v906
    %1054 = vst [vmem:[%s6 + $0x60] sm:$0xff] %v955
    %1055 = vst.msk [vmem:[%s6 + $0x68] sm:$0xff] %vm1047, %v1004
    %1056 = vst [vmem:[%s6 + $0x70] sm:$0xff] %v713
    %1057 = vst [vmem:[%s6 + $0x78] sm:$0xff] %v762
    %1058 = vst [vmem:[%s6 + $0x80] sm:$0xff] %v811
    %1059 = vst [vmem:[%s6 + $0x88] sm:$0xff] %v860
    %1060 = vst [vmem:[%s6 + $0x90] sm:$0xff] %v909
    %1061 = vst [vmem:[%s6 + $0x98] sm:$0xff] %v958
    %1062 = vst.msk [vmem:[%s6 + $0xa0] sm:$0xff] %vm1047, %v1007
    %1063 = vst [vmem:[%s6 + $0xa8] sm:$0xff] %v715
    %1064 = vst [vmem:[%s6 + $0xb0] sm:$0xff] %v764
    %1065 = vst [vmem:[%s6 + $0xb8] sm:$0xff] %v813
    %1066 = vst [vmem:[%s6 + $0xc0] sm:$0xff] %v862
    %1067 = vst [vmem:[%s6 + $0xc8] sm:$0xff] %v911
    %1068 = vst [vmem:[%s6 + $0xd0] sm:$0xff] %v960
    %1069 = vst.msk [vmem:[%s6 + $0xd8] sm:$0xff] %vm1047, %v1009
    %1070 = vst [vmem:[%s6 + $0xe0] sm:$0xff] %v718
    %1071 = vst [vmem:[%s6 + $0xe8] sm:$0xff] %v767
    %1072 = vst [vmem:[%s6 + $0xf0] sm:$0xff] %v816
    %1073 = vst [vmem:[%s6 + $0xf8] sm:$0xff] %v865
    %1074 = vst [vmem:[%s6 + $0x100] sm:$0xff] %v914
    %1075 = vst [vmem:[%s6 + $0x108] sm:$0xff] %v963
    %1076 = vst.msk [vmem:[%s6 + $0x110] sm:$0xff] %vm1047, %v1012
    %1077 = vst [vmem:[%s6 + $0x118] sm:$0xff] %v720
    %1078 = vst [vmem:[%s6 + $0x120] sm:$0xff] %v769
    %1079 = vst [vmem:[%s6 + $0x128] sm:$0xff] %v818
    %1080 = vst [vmem:[%s6 + $0x130] sm:$0xff] %v867
    %1081 = vst [vmem:[%s6 + $0x138] sm:$0xff] %v916
    %1082 = vst [vmem:[%s6 + $0x140] sm:$0xff] %v965
    %1083 = vst.msk [vmem:[%s6 + $0x148] sm:$0xff] %vm1047, %v1014
    %1084 = vst [vmem:[%s6 + $0x150] sm:$0xff] %v723
    %1085 = vst [vmem:[%s6 + $0x158] sm:$0xff] %v772
    %1086 = vst [vmem:[%s6 + $0x160] sm:$0xff] %v821
    %1087 = vst [vmem:[%s6 + $0x168] sm:$0xff] %v870
    %1088 = vst [vmem:[%s6 + $0x170] sm:$0xff] %v919
    %1089 = vst [vmem:[%s6 + $0x178] sm:$0xff] %v968
    %1090 = vst.msk [vmem:[%s6 + $0x180] sm:$0xff] %vm1047, %v1017
    %1091 = vst [vmem:[%s6 + $0x188] sm:$0xff] %v725
    %1092 = vst [vmem:[%s6 + $0x190] sm:$0xff] %v774
    %1093 = vst [vmem:[%s6 + $0x198] sm:$0xff] %v823
    %1094 = vst [vmem:[%s6 + $0x1a0] sm:$0xff] %v872
    %1095 = vst [vmem:[%s6 + $0x1a8] sm:$0xff] %v921
    %1096 = vst [vmem:[%s6 + $0x1b0] sm:$0xff] %v970
    %1097 = vst.msk [vmem:[%s6 + $0x1b8] sm:$0xff] %vm1047, %v1019
    %1098 = vst [vmem:[%s6 + $0x1c0] sm:$0xff] %v728
    %1099 = vst [vmem:[%s6 + $0x1c8] sm:$0xff] %v777
    %1100 = vst [vmem:[%s6 + $0x1d0] sm:$0xff] %v826
    %1101 = vst [vmem:[%s6 + $0x1d8] sm:$0xff] %v875
    %1102 = vst [vmem:[%s6 + $0x1e0] sm:$0xff] %v924
    %1103 = vst [vmem:[%s6 + $0x1e8] sm:$0xff] %v973
    %1104 = vst.msk [vmem:[%s6 + $0x1f0] sm:$0xff] %vm1047, %v1022
    %1105 = vst [vmem:[%s6 + $0x1f8] sm:$0xff] %v730
    %1106 = vst [vmem:[%s6 + $0x200] sm:$0xff] %v779
    %1107 = vst [vmem:[%s6 + $0x208] sm:$0xff] %v828
    %1108 = vst [vmem:[%s6 + $0x210] sm:$0xff] %v877
    %1109 = vst [vmem:[%s6 + $0x218] sm:$0xff] %v926
    %1110 = vst [vmem:[%s6 + $0x220] sm:$0xff] %v975
    %1111 = vst.msk [vmem:[%s6 + $0x228] sm:$0xff] %vm1047, %v1024
    %1112 = vst [vmem:[%s6 + $0x230] sm:$0xff] %v733
    %1113 = vst [vmem:[%s6 + $0x238] sm:$0xff] %v782
    %1114 = vst [vmem:[%s6 + $0x240] sm:$0xff] %v831
    %1115 = vst [vmem:[%s6 + $0x248] sm:$0xff] %v880
    %1116 = vst [vmem:[%s6 + $0x250] sm:$0xff] %v929
    %1117 = vst [vmem:[%s6 + $0x258] sm:$0xff] %v978
    %1118 = vst.msk [vmem:[%s6 + $0x260] sm:$0xff] %vm1047, %v1027
    %1119 = vst [vmem:[%s6 + $0x268] sm:$0xff] %v735
    %1120 = vst [vmem:[%s6 + $0x270] sm:$0xff] %v784
    %1121 = vst [vmem:[%s6 + $0x278] sm:$0xff] %v833
    %1122 = vst [vmem:[%s6 + $0x280] sm:$0xff] %v882
    %1123 = vst [vmem:[%s6 + $0x288] sm:$0xff] %v931
    %1124 = vst [vmem:[%s6 + $0x290] sm:$0xff] %v980
    %1125 = vst.msk [vmem:[%s6 + $0x298] sm:$0xff] %vm1047, %v1029
    %1126 = vst [vmem:[%s6 + $0x2a0] sm:$0xff] %v738
    %1127 = vst [vmem:[%s6 + $0x2a8] sm:$0xff] %v787
    %1128 = vst [vmem:[%s6 + $0x2b0] sm:$0xff] %v836
    %1129 = vst [vmem:[%s6 + $0x2b8] sm:$0xff] %v885
    %1130 = vst [vmem:[%s6 + $0x2c0] sm:$0xff] %v934
    %1131 = vst [vmem:[%s6 + $0x2c8] sm:$0xff] %v983
    %1132 = vst.msk [vmem:[%s6 + $0x2d0] sm:$0xff] %vm1047, %v1032
    %1133 = vst [vmem:[%s6 + $0x2d8] sm:$0xff] %v740
    %1134 = vst [vmem:[%s6 + $0x2e0] sm:$0xff] %v789
    %1135 = vst [vmem:[%s6 + $0x2e8] sm:$0xff] %v838
    %1136 = vst [vmem:[%s6 + $0x2f0] sm:$0xff] %v887
    %1137 = vst [vmem:[%s6 + $0x2f8] sm:$0xff] %v936
    %1138 = vst [vmem:[%s6 + $0x300] sm:$0xff] %v985
    %1139 = vst.msk [vmem:[%s6 + $0x308] sm:$0xff] %vm1047, %v1034
    %1140 = vst [vmem:[%s6 + $0x310] sm:$0xff] %v743
    %1141 = vst [vmem:[%s6 + $0x318] sm:$0xff] %v792
    %1142 = vst [vmem:[%s6 + $0x320] sm:$0xff] %v841
    %1143 = vst [vmem:[%s6 + $0x328] sm:$0xff] %v890
    %1144 = vst [vmem:[%s6 + $0x330] sm:$0xff] %v939
    %1145 = vst [vmem:[%s6 + $0x338] sm:$0xff] %v988
    %1146 = vst.msk [vmem:[%s6 + $0x340] sm:$0xff] %vm1047, %v1037
    %1147 = vst [vmem:[%s6 + $0x348] sm:$0xff] %v745
    %1148 = vst [vmem:[%s6 + $0x350] sm:$0xff] %v794
    %1149 = vst [vmem:[%s6 + $0x358] sm:$0xff] %v843
    %1150 = vst [vmem:[%s6 + $0x360] sm:$0xff] %v892
    %1151 = vst [vmem:[%s6 + $0x368] sm:$0xff] %v941
    %1152 = vst [vmem:[%s6 + $0x370] sm:$0xff] %v990
    %1153 = vst.msk [vmem:[%s6 + $0x378] sm:$0xff] %vm1047, %v1039
    // Predicated region
    $region30: #{tpu_custom_call.1} parent=1 // pred_check
      _
    $region31: #{tpu_custom_call.1} parent=1 // pred_check_branch
      %1155 = sbr.rel (0) target = $region33
    $region32: #{tpu_custom_call.1} parent=1 // pred_region
      _
    $region33: #{tpu_custom_call.1} parent=1 // pred_fallthru
      _
    // Predicated region
    $region34: #{tpu_custom_call.1} parent=1 // pred_check
      _
    $region35: #{tpu_custom_call.1} parent=1 // pred_check_branch
      %1157 = sbr.rel (0) target = $region37
    $region36: #{tpu_custom_call.1} parent=1 // pred_region
      _
    $region37: #{tpu_custom_call.1} parent=1 // pred_fallthru
      _
    %1158 = vsyncpa [#allocation3], 1

</llo_original>
